<compile_context>
chip_gen: v5e
topology: v5e:2x2
jax: 0.10.0
libtpu: 0.0.40
codegen_flags: <defaults>
</compile_context>

<pallas_src>
import functools

import numpy as np
import jax
import jax.numpy as jnp
from jax.experimental import pallas as pl
from jax.experimental.pallas import tpu as pltpu


def _round_up(n, m):
    return ((n + m - 1) // m) * m


def _wide_deep_kernel(x_ref, wcat_ref, w2_ref, wo_ref, b_ref, out_ref, *, A, H1, H2):
    """One (TB, F) batch tile -> (TB, A) sigmoid(wide + deep)."""
    wdtype = wcat_ref.dtype
    # Mirrors x.float(); x holds 0/1 indicators so the narrow->bf16 cast is exact.
    x = x_ref[...].astype(wdtype)

    # Fused wide + first deep layer: one N = A+H1 (=256) MXU matmul, f32 accumulate.
    y = jnp.dot(x, wcat_ref[...], preferred_element_type=jnp.float32)      # (TB, A+H1)
    wide = y[:, :A]                                                        # x @ W_lin
    h = jnp.maximum(y[:, A:] + b_ref[:, :H1], 0.0)                         # ReLU(x@W1+b1)

    # Second deep layer (H2 zero-padded to 128 -> full-width MXU, exact).
    h = jnp.dot(h.astype(wdtype), w2_ref[...], preferred_element_type=jnp.float32)
    h = jnp.maximum(h + b_ref[:, H1:H1 + H2], 0.0)                         # (TB, H2)

    # Output deep layer.
    deep = jnp.dot(h.astype(wdtype), wo_ref[...], preferred_element_type=jnp.float32)

    # b_ref[:, H1+H2:] holds b_lin + bo (folded once in pack_params).
    out_ref[...] = jax.nn.sigmoid(wide + deep + b_ref[:, H1 + H2:])


def pack_params(params, *, weight_dtype=jnp.bfloat16):
    """One-time packing of the module weights into the kernel's fused layout."""
    F, A = params["w_lin"].shape
    H1 = params["w1"].shape[1]
    H2 = params["w2"].shape[1]
    H1p = _round_up(H1, 128)
    H2p = _round_up(H2, 128)

    w1 = jnp.pad(params["w1"], ((0, 0), (0, H1p - H1)))
    b1 = jnp.pad(params["b1"], ((0, 0), (0, H1p - H1)))
    w2 = jnp.pad(params["w2"], ((0, H1p - H1), (0, H2p - H2)))
    b2 = jnp.pad(params["b2"], ((0, 0), (0, H2p - H2)))
    wo = jnp.pad(params["wo"], ((0, H2p - H2), (0, 0)))

    wcat = jnp.concatenate([params["w_lin"], w1], axis=1).astype(weight_dtype)   # (F, A+H1p)
    bpack = jnp.concatenate([b1, b2, params["b_lin"] + params["bo"]],
                            axis=1).astype(jnp.float32)                          # (1, H1p+H2p+A)

    return {
        "wcat": wcat,
        "w2": w2.astype(weight_dtype),
        "wo": wo.astype(weight_dtype),
        "b": bpack,
        "A": A, "H1": H1p, "H2": H2p, "F": F,
    }


def wide_and_deep_forward(x, packed, *, tb=None):
    """x: (B, sum(field_dims)) 0/1 indicators, any dtype (int8/bf16 minimizes DMA).

    Returns float32 (B, num_ADR).
    """
    B, F = x.shape
    assert F == packed["F"], "feature width must equal sum(field_dims)"
    A, H1, H2 = packed["A"], packed["H1"], packed["H2"]
    wcat, w2, wo, b = packed["wcat"], packed["w2"], packed["wo"], packed["b"]

    if tb is None:
        # Small batches: balanced <=2-tile grid (one tile per v7x TensorCore).
        # Large batches: 512-row tiles to amortize per-grid-step overhead.
        tb = 512 if B >= 1024 else -(-B // 2)
    # Multiple of 32 rows: safe sublane tiling for int8/bf16/f32 inputs alike.
    TB = max(32, min(_round_up(tb, 32), _round_up(B, 32)))
    grid = (pl.cdiv(B, TB),)

    kernel = functools.partial(_wide_deep_kernel, A=A, H1=H1, H2=H2)

    return pl.pallas_call(
        kernel,
        out_shape=jax.ShapeDtypeStruct((B, A), jnp.float32),
        grid_spec=pltpu.PrefetchScalarGridSpec(
            num_scalar_prefetch=0,
            grid=grid,
            in_specs=[
                pl.BlockSpec((TB, F), lambda i: (i, 0)),      # streamed batch tile
                pl.BlockSpec(wcat.shape, lambda i: (0, 0)),   # resident fused weights
                pl.BlockSpec(w2.shape, lambda i: (0, 0)),
                pl.BlockSpec(wo.shape, lambda i: (0, 0)),
                pl.BlockSpec(b.shape, lambda i: (0, 0)),      # packed biases
            ],
            out_specs=pl.BlockSpec((TB, A), lambda i: (i, 0)),
        ),
        compiler_params=pltpu.CompilerParams(
            dimension_semantics=("parallel",)),                # tiles split across TCs
    )(x, wcat, w2, wo, b)


def wide_and_deep_reference(x, params):
    """Pure-JAX f32 reference mirroring the PyTorch forward (eval mode)."""
    xf = x.astype(jnp.float32)
    wide = xf @ params["w_lin"] + params["b_lin"]
    h = jnp.maximum(xf @ params["w1"] + params["b1"], 0.0)
    h = jnp.maximum(h @ params["w2"] + params["b2"], 0.0)
    deep = h @ params["wo"] + params["bo"]
    return jax.nn.sigmoid(wide + deep)


def init_params(key, field_dims, mlp_dims, num_ADR):
    F = sum(field_dims)
    h1, h2 = mlp_dims
    ks = jax.random.split(key, 7)
    return {
        "w_lin": 0.1 * jax.random.normal(ks[0], (F, num_ADR), jnp.float32),
        "b_lin": jnp.zeros((1, num_ADR), jnp.float32),
        "w1": 0.1 * jax.random.normal(ks[1], (F, h1), jnp.float32),
        "b1": 0.01 * jax.random.normal(ks[2], (1, h1), jnp.float32),
        "w2": 0.1 * jax.random.normal(ks[3], (h1, h2), jnp.float32),
        "b2": 0.01 * jax.random.normal(ks[4], (1, h2), jnp.float32),
        "wo": 0.1 * jax.random.normal(ks[5], (h2, num_ADR), jnp.float32),
        "bo": 0.01 * jax.random.normal(ks[6], (1, num_ADR), jnp.float32),
    }


if __name__ == "__main__":
    field_dims = [32, 32, 32, 32]   # num_features = sum(field_dims) = 128 (lane-dense)
    mlp_dims = (128, 64)            # H2 = 64 is zero-padded to 128 inside pack_params
    num_ADR = 128                   # lane-dense output
    batch = 300                     # not a multiple of TB -> exercises the no-pad tail

    key = jax.random.PRNGKey(0)
    k_param, k_x = jax.random.split(key)
    params = init_params(k_param, field_dims, mlp_dims, num_ADR)
    packed = pack_params(params)    # one-time (model-load-time) weight fusion/cast

    # Multi-hot drug indicator vector; stored int8 (exact, 4x less DMA than f32),
    # cast to float inside the kernel (mirrors x.float()).
    x = jax.random.bernoulli(k_x, 0.05, (batch, sum(field_dims))).astype(jnp.int8)

    out = jax.block_until_ready(wide_and_deep_forward(x, packed))   # TB=160, grid=2
    ref = jax.block_until_ready(wide_and_deep_reference(x, params))

    if out.shape != (batch, num_ADR):
        raise AssertionError(f"bad output shape {out.shape}")
    # bf16 matmul operands (f32 accumulate) vs f32 reference: relax tolerance.
    if not np.allclose(np.asarray(out), np.asarray(ref), atol=1e-2):
        raise AssertionError("Pallas WideAndDeep kernel mismatch vs JAX reference")

    print("KERNEL_OK")
</pallas_src>

<mosaic_0001>
module attributes {stable_mosaic.version = 11 : i64} {
  func.func @_wide_deep_kernel(%arg0: i32, %arg1: memref<160x128xi8, #tpu.memory_space<vmem>>, %arg2: memref<128x256xbf16, #tpu.memory_space<vmem>>, %arg3: memref<128x128xbf16, #tpu.memory_space<vmem>>, %arg4: memref<128x128xbf16, #tpu.memory_space<vmem>>, %arg5: memref<1x384xf32, #tpu.memory_space<vmem>>, %arg6: memref<160x128xf32, #tpu.memory_space<vmem>>) attributes {dimension_semantics = [#tpu.dimension_semantics<parallel>], iteration_bounds = array<i64: 2>, scalar_prefetch = 0 : i64, scratch_operands = 0 : i64, tpu.core_type = #tpu.core_type<tc>, window_params = [{transform_indices = @transform_0, window_bounds = array<i64: 160, 128>}, {pipeline_mode = #tpu.pipeline_mode<synchronous>, transform_indices = @transform_1, window_bounds = array<i64: 128, 256>}, {pipeline_mode = #tpu.pipeline_mode<synchronous>, transform_indices = @transform_2, window_bounds = array<i64: 128, 128>}, {pipeline_mode = #tpu.pipeline_mode<synchronous>, transform_indices = @transform_3, window_bounds = array<i64: 128, 128>}, {pipeline_mode = #tpu.pipeline_mode<synchronous>, transform_indices = @transform_4, window_bounds = array<i64: 1, 384>}, {transform_indices = @transform_5, window_bounds = array<i64: 160, 128>}]} {
    %c0 = arith.constant 0 : index
    %c0_0 = arith.constant 0 : index
    %0 = vector.load %arg1[%c0, %c0_0] : memref<160x128xi8, #tpu.memory_space<vmem>>, vector<160x128xi8>
    %1 = arith.sitofp %0 : vector<160x128xi8> to vector<160x128xbf16>
    %c0_1 = arith.constant 0 : index
    %c0_2 = arith.constant 0 : index
    %2 = vector.load %arg2[%c0_1, %c0_2] : memref<128x256xbf16, #tpu.memory_space<vmem>>, vector<128x256xbf16>
    %cst = arith.constant dense<0.000000e+00> : vector<160x256xf32>
    %3 = tpu.matmul %1, %2, %cst {dimension_numbers = #tpu.dot_dimension_numbers<[1], [0], [0], [1], [0, 0, 1, 1], [], []>} : vector<160x128xbf16>, vector<128x256xbf16>, vector<160x256xf32> -> vector<160x256xf32>
    %4 = vector.extract_strided_slice %3 {offsets = [0, 0], sizes = [160, 128], strides = [1, 1]} : vector<160x256xf32> to vector<160x128xf32>
    %5 = vector.extract_strided_slice %3 {offsets = [0, 128], sizes = [160, 128], strides = [1, 1]} : vector<160x256xf32> to vector<160x128xf32>
    %c0_3 = arith.constant 0 : index
    %c0_4 = arith.constant 0 : index
    %6 = vector.load %arg5[%c0_3, %c0_4] : memref<1x384xf32, #tpu.memory_space<vmem>>, vector<1x128xf32>
    %7 = vector.broadcast %6 : vector<1x128xf32> to vector<160x128xf32>
    %8 = arith.addf %5, %7 : vector<160x128xf32>
    %cst_5 = arith.constant 0.000000e+00 : f32
    %9 = vector.broadcast %cst_5 : f32 to vector<160x128xf32>
    %10 = arith.maximumf %8, %9 : vector<160x128xf32>
    %11 = arith.truncf %10 : vector<160x128xf32> to vector<160x128xbf16>
    %c0_6 = arith.constant 0 : index
    %c0_7 = arith.constant 0 : index
    %12 = vector.load %arg3[%c0_6, %c0_7] : memref<128x128xbf16, #tpu.memory_space<vmem>>, vector<128x128xbf16>
    %cst_8 = arith.constant dense<0.000000e+00> : vector<160x128xf32>
    %13 = tpu.matmul %11, %12, %cst_8 {dimension_numbers = #tpu.dot_dimension_numbers<[1], [0], [0], [1], [0, 0, 1, 1], [], []>} : vector<160x128xbf16>, vector<128x128xbf16>, vector<160x128xf32> -> vector<160x128xf32>
    %c0_9 = arith.constant 0 : index
    %c128 = arith.constant 128 : index
    %14 = vector.load %arg5[%c0_9, %c128] : memref<1x384xf32, #tpu.memory_space<vmem>>, vector<1x128xf32>
    %15 = vector.broadcast %14 : vector<1x128xf32> to vector<160x128xf32>
    %16 = arith.addf %13, %15 : vector<160x128xf32>
    %cst_10 = arith.constant 0.000000e+00 : f32
    %17 = vector.broadcast %cst_10 : f32 to vector<160x128xf32>
    %18 = arith.maximumf %16, %17 : vector<160x128xf32>
    %19 = arith.truncf %18 : vector<160x128xf32> to vector<160x128xbf16>
    %c0_11 = arith.constant 0 : index
    %c0_12 = arith.constant 0 : index
    %20 = vector.load %arg4[%c0_11, %c0_12] : memref<128x128xbf16, #tpu.memory_space<vmem>>, vector<128x128xbf16>
    %cst_13 = arith.constant dense<0.000000e+00> : vector<160x128xf32>
    %21 = tpu.matmul %19, %20, %cst_13 {dimension_numbers = #tpu.dot_dimension_numbers<[1], [0], [0], [1], [0, 0, 1, 1], [], []>} : vector<160x128xbf16>, vector<128x128xbf16>, vector<160x128xf32> -> vector<160x128xf32>
    %22 = arith.addf %4, %21 : vector<160x128xf32>
    %c0_14 = arith.constant 0 : index
    %c256 = arith.constant 256 : index
    %23 = vector.load %arg5[%c0_14, %c256] : memref<1x384xf32, #tpu.memory_space<vmem>>, vector<1x128xf32>
    %24 = vector.broadcast %23 : vector<1x128xf32> to vector<160x128xf32>
    %25 = arith.addf %22, %24 : vector<160x128xf32>
    %26 = arith.negf %25 : vector<160x128xf32>
    %27 = math.exp %26 : vector<160x128xf32>
    %cst_15 = arith.constant 1.000000e+00 : f32
    %28 = vector.broadcast %cst_15 : f32 to vector<160x128xf32>
    %29 = arith.addf %28, %27 : vector<160x128xf32>
    %30 = arith.divf %28, %29 : vector<160x128xf32>
    %c0_16 = arith.constant 0 : index
    %c0_17 = arith.constant 0 : index
    %31 = vector.load %arg6[%c0_16, %c0_17] : memref<160x128xf32, #tpu.memory_space<vmem>>, vector<160x128xf32>
    tpu.vector_store %arg6[%c0_16, %c0_17], %30 {strides = array<i32>} : memref<160x128xf32, #tpu.memory_space<vmem>>, vector<160x128xf32>,
    return
  }
  func.func @transform_0(%arg0: i32) -> (i32, i32) {
    %c0_i32 = arith.constant 0 : i32
    %c0_i32_0 = arith.constant 0 : i32
    return %arg0, %c0_i32 : i32, i32
  }
  func.func @transform_1(%arg0: i32) -> (i32, i32) {
    %c0_i32 = arith.constant 0 : i32
    %c0_i32_0 = arith.constant 0 : i32
    %c0_i32_1 = arith.constant 0 : i32
    return %c0_i32, %c0_i32_0 : i32, i32
  }
  func.func @transform_2(%arg0: i32) -> (i32, i32) {
    %c0_i32 = arith.constant 0 : i32
    %c0_i32_0 = arith.constant 0 : i32
    %c0_i32_1 = arith.constant 0 : i32
    return %c0_i32, %c0_i32_0 : i32, i32
  }
  func.func @transform_3(%arg0: i32) -> (i32, i32) {
    %c0_i32 = arith.constant 0 : i32
    %c0_i32_0 = arith.constant 0 : i32
    %c0_i32_1 = arith.constant 0 : i32
    return %c0_i32, %c0_i32_0 : i32, i32
  }
  func.func @transform_4(%arg0: i32) -> (i32, i32) {
    %c0_i32 = arith.constant 0 : i32
    %c0_i32_0 = arith.constant 0 : i32
    %c0_i32_1 = arith.constant 0 : i32
    return %c0_i32, %c0_i32_0 : i32, i32
  }
  func.func @transform_5(%arg0: i32) -> (i32, i32) {
    %c0_i32 = arith.constant 0 : i32
    %c0_i32_0 = arith.constant 0 : i32
    return %arg0, %c0_i32 : i32, i32
  }
}

</mosaic_0001>

<llo_original>
// kernel: tpu_custom_call.1
$region0: #{tpu_custom_call.1}
  #allocation0 [shape = 'u32[]', space=smem, size = 0x4, offset = 0x4, fixed_abs, tag = 'smem constant byte address 0x4 - core index']
  #allocation1 [shape = 'u32[72,128]{1,0:T(1,128)}', space=vmem, size = 0x9000, scoped, tag = 'internal scratch']
  %s0 = inlined_call_operand.hbm [shape: s8[300,128], index: 0, kind: input, shape index: {}]
  %s1 = inlined_call_operand.hbm [shape: bf16[128,256], index: 1, kind: input, shape index: {}]
  %s2 = inlined_call_operand.hbm [shape: bf16[128,128], index: 2, kind: input, shape index: {}]
  %s3 = inlined_call_operand.hbm [shape: bf16[128,128], index: 3, kind: input, shape index: {}]
  %s4 = inlined_call_operand.vmem [shape: f32[1,384], index: 4, kind: input, shape index: {}]
  %s5 = inlined_call_operand.hbm [shape: f32[300,128], index: 5, kind: output, shape index: {}]
  %s6 = sld [smem:[#allocation0]]
  $region69: #{tpu_custom_call.1} parent=0
    _
  %s8 = ssub.s32 1, %s6
  %s9 = scalar_select 0, %s8, %s6
  $region1: #{tpu_custom_call.1} parent=0
    #allocation2 [shape = 'u8[40960]{0}', space=vmem, size = 0xa000, scoped, tag = 'input window, operand 0']
    #allocation3 [shape = 's32[2]{0}', space=sflag, size = 0x8, scoped, tag = 'scoped memory for tpu_custom_call.1']
    #allocation4 [shape = 's32[2]{0}', space=sflag, size = 0x8, scoped, tag = 'scoped memory for tpu_custom_call.1']
    #allocation5 [shape = 'u8[65536]{0}', space=vmem, size = 0x10000, scoped, tag = 'input window, operand 1, single buffered']
    #allocation6 [shape = 's32[1]{0}', space=sflag, size = 0x4, scoped, tag = 'scoped memory for tpu_custom_call.1']
    #allocation7 [shape = 'u8[32768]{0}', space=vmem, size = 0x8000, scoped, tag = 'input window, operand 2, single buffered']
    #allocation8 [shape = 'u8[32768]{0}', space=vmem, size = 0x8000, scoped, tag = 'input window, operand 3, single buffered']
    #allocation9 [shape = 's32[1]{0}', space=sflag, size = 0x4, scoped, tag = 'scoped memory for tpu_custom_call.1']
    #allocation10 [shape = 'u8[163840]{0}', space=vmem, size = 0x28000, scoped, tag = 'output window, operand 0']
    %10 = vsyncpa [#allocation3], 0
    %s11 = scalar_lea.sflag [#allocation3], 1
    %12 = vsyncpa %s11, 0
    %13 = vsyncpa [#allocation6], 0
    %14 = vsyncpa [#allocation9], 0
    %15 = vsyncpa [#allocation4], 0
    %s16 = scalar_lea.sflag [#allocation4], 1
    %17 = vsyncpa %s16, 0
    loop: start=0, step=1, limit=4
    $region2: #{tpu_custom_call.1} parent=1 // loop_pre_header
      _
    $region3: #{tpu_custom_call.1} parent=1 // loop_header
      %s19 = sphi 0, %s23
      %p20 = scmp.ge.s32.totalorder %s19, 4
      %s29 = sphi 0, %s31
      %s32 = sphi 0, %s29
      %s33 = sphi 0, %s32
      %s49 = sphi 0, %s33
      %s53 = sphi 0, %s53
      %s55 = sphi 0, %s53
      %s56 = sphi 0, %s55
      %s70 = sphi 0, %s56
      %s74 = sphi 0, %s74
      %s76 = sphi 0, %s74
      %s77 = sphi 0, %s76
      %s91 = sphi 0, %s77
      %s95 = sphi 0, %s95
      %s97 = sphi 0, %s95
      %s98 = sphi 0, %s97
      %s112 = sphi 0, %s98
      %s116 = sphi 0, %s116
      %s118 = sphi 0, %s116
      %s119 = sphi 0, %s118
      %s133 = sphi 0, %s119
      %s139 = sphi 0, %s141
      %s142 = sphi 0, %s139
      %s143 = sphi 0, %s142
      %s159 = sphi 0, %s143
    $region4: #{tpu_custom_call.1} parent=1 // loop_header_branch
      %22 = sbr.rel (%p20) target = $region8
    $region5: #{tpu_custom_call.1} parent=1 // loop_body
      %s24 = ssub.s32 %s19, 1
      %s25 = ssub.s32 %s19, 2
      %s26 = sadd.s32 %s19, 1
      %s27 = ssub.s32 %s19, %s26
      %p28 = scmp.eq.s32.totalorder %s27, 0
      %s30 = sadd.s32 %s29, 1
      %s31 = scalar_select %p28, %s29, %s30
      %p34 = pneg %p28
      %p35 = scmp.eq.s32.totalorder %s19, 1
      %p36 = por %p34, %p35
      %p37 = scmp.ne.s32.totalorder %s29, %s32
      %p38 = scmp.eq.s32.totalorder %s19, 0
      %p39 = por %p37, %p38
      %p40 = scmp.ne.s32.totalorder %s29, %s32
      %p41 = scmp.eq.s32.totalorder %s24, 1
      %p42 = por %p40, %p41
      %p43 = scmp.ne.s32.totalorder %s32, %s33
      %p44 = scmp.eq.s32.totalorder %s24, 0
      %p45 = por %p43, %p44
      %p46 = scmp.ne.s32.totalorder %s32, %s33
      %p47 = scmp.eq.s32.totalorder %s25, 1
      %p48 = por %p46, %p47
      %p50 = scmp.ne.s32.totalorder %s33, %s49
      %p51 = scmp.eq.s32.totalorder %s25, 0
      %p52 = por %p50, %p51
      %s54 = sadd.s32 %s53, 1
      %p57 = scmp.eq.s32.totalorder %s19, 1
      %p58 = scmp.ne.s32.totalorder %s53, %s55
      %p59 = scmp.eq.s32.totalorder %s19, 0
      %p60 = por %p58, %p59
      %p61 = scmp.ne.s32.totalorder %s53, %s55
      %p62 = scmp.eq.s32.totalorder %s24, 1
      %p63 = por %p61, %p62
      %p64 = scmp.ne.s32.totalorder %s55, %s56
      %p65 = scmp.eq.s32.totalorder %s24, 0
      %p66 = por %p64, %p65
      %p67 = scmp.ne.s32.totalorder %s55, %s56
      %p68 = scmp.eq.s32.totalorder %s25, 1
      %p69 = por %p67, %p68
      %p71 = scmp.ne.s32.totalorder %s56, %s70
      %p72 = scmp.eq.s32.totalorder %s25, 0
      %p73 = por %p71, %p72
      %s75 = sadd.s32 %s74, 1
      %p78 = scmp.eq.s32.totalorder %s19, 1
      %p79 = scmp.ne.s32.totalorder %s74, %s76
      %p80 = scmp.eq.s32.totalorder %s19, 0
      %p81 = por %p79, %p80
      %p82 = scmp.ne.s32.totalorder %s74, %s76
      %p83 = scmp.eq.s32.totalorder %s24, 1
      %p84 = por %p82, %p83
      %p85 = scmp.ne.s32.totalorder %s76, %s77
      %p86 = scmp.eq.s32.totalorder %s24, 0
      %p87 = por %p85, %p86
      %p88 = scmp.ne.s32.totalorder %s76, %s77
      %p89 = scmp.eq.s32.totalorder %s25, 1
      %p90 = por %p88, %p89
      %p92 = scmp.ne.s32.totalorder %s77, %s91
      %p93 = scmp.eq.s32.totalorder %s25, 0
      %p94 = por %p92, %p93
      %s96 = sadd.s32 %s95, 1
      %p99 = scmp.eq.s32.totalorder %s19, 1
      %p100 = scmp.ne.s32.totalorder %s95, %s97
      %p101 = scmp.eq.s32.totalorder %s19, 0
      %p102 = por %p100, %p101
      %p103 = scmp.ne.s32.totalorder %s95, %s97
      %p104 = scmp.eq.s32.totalorder %s24, 1
      %p105 = por %p103, %p104
      %p106 = scmp.ne.s32.totalorder %s97, %s98
      %p107 = scmp.eq.s32.totalorder %s24, 0
      %p108 = por %p106, %p107
      %p109 = scmp.ne.s32.totalorder %s97, %s98
      %p110 = scmp.eq.s32.totalorder %s25, 1
      %p111 = por %p109, %p110
      %p113 = scmp.ne.s32.totalorder %s98, %s112
      %p114 = scmp.eq.s32.totalorder %s25, 0
      %p115 = por %p113, %p114
      %s117 = sadd.s32 %s116, 1
      %p120 = scmp.eq.s32.totalorder %s19, 1
      %p121 = scmp.ne.s32.totalorder %s116, %s118
      %p122 = scmp.eq.s32.totalorder %s19, 0
      %p123 = por %p121, %p122
      %p124 = scmp.ne.s32.totalorder %s116, %s118
      %p125 = scmp.eq.s32.totalorder %s24, 1
      %p126 = por %p124, %p125
      %p127 = scmp.ne.s32.totalorder %s118, %s119
      %p128 = scmp.eq.s32.totalorder %s24, 0
      %p129 = por %p127, %p128
      %p130 = scmp.ne.s32.totalorder %s118, %s119
      %p131 = scmp.eq.s32.totalorder %s25, 1
      %p132 = por %p130, %p131
      %p134 = scmp.ne.s32.totalorder %s119, %s133
      %p135 = scmp.eq.s32.totalorder %s25, 0
      %p136 = por %p134, %p135
      %s137 = ssub.s32 %s19, %s26
      %p138 = scmp.eq.s32.totalorder %s137, 0
      %s140 = sadd.s32 %s139, 1
      %s141 = scalar_select %p138, %s139, %s140
      %p144 = pneg %p138
      %p145 = scmp.eq.s32.totalorder %s19, 1
      %p146 = por %p144, %p145
      %p147 = scmp.ne.s32.totalorder %s139, %s142
      %p148 = scmp.eq.s32.totalorder %s19, 0
      %p149 = por %p147, %p148
      %p150 = scmp.ne.s32.totalorder %s139, %s142
      %p151 = scmp.eq.s32.totalorder %s24, 1
      %p152 = por %p150, %p151
      %p153 = scmp.ne.s32.totalorder %s142, %s143
      %p154 = scmp.eq.s32.totalorder %s24, 0
      %p155 = por %p153, %p154
      %p156 = scmp.ne.s32.totalorder %s142, %s143
      %p157 = scmp.eq.s32.totalorder %s25, 1
      %p158 = por %p156, %p157
      %p160 = scmp.ne.s32.totalorder %s143, %s159
      %p161 = scmp.eq.s32.totalorder %s25, 0
      %p162 = por %p160, %p161
      %p163 = scmp.le.s32.totalorder 1, %s19
      %p164 = scmp.lt.s32.totalorder %s19, 3
      %p165 = pnand %p163, %p164
      %p166 = pneg %p165
      // Predicated region
      $region9: #{tpu_custom_call.1} parent=5 // pred_check
        _
      $region10: #{tpu_custom_call.1} parent=5 // pred_check_branch
        %168 = sbr.rel (%p165) target = $region12
      $region11: #{tpu_custom_call.1} parent=5 // pred_region
        %s169 = ssub.s32 %s19, 1
        // Predicated region
        $region13: #{tpu_custom_call.1} parent=11 // pred_check
          %p170 = pneg %p66
        $region14: #{tpu_custom_call.1} parent=11 // pred_check_branch
          %172 = sbr.rel (%p170) target = $region16
        $region15: #{tpu_custom_call.1} parent=11 // pred_region
          %174 = vsyncadd [#allocation6], 0
          %s175 = sshll.u32 %s1, 4
          %s176 = int_to_ptr.hbm [resolvable:$true] %s175
          %s177 = sshll.u32 [#allocation5], 4
          %s178 = int_to_ptr.vmem [resolvable:$true] %s177
          %183 = dma.hbm_to_vmem [thread:$0]  %s176, 2048, %s178, [#allocation6], 128, 128, 8
        $region16: #{tpu_custom_call.1} parent=11 // pred_fallthru
          _
        // Predicated region
        $region17: #{tpu_custom_call.1} parent=11 // pred_check
          %p184 = pneg %p87
        $region18: #{tpu_custom_call.1} parent=11 // pred_check_branch
          %186 = sbr.rel (%p184) target = $region20
        $region19: #{tpu_custom_call.1} parent=11 // pred_region
          %188 = vsyncadd [#allocation6], 0
          %s189 = sshll.u32 %s2, 4
          %s190 = int_to_ptr.hbm [resolvable:$true] %s189
          %s191 = sshll.u32 [#allocation7], 4
          %s192 = int_to_ptr.vmem [resolvable:$true] %s191
          %197 = dma.hbm_to_vmem [thread:$0]  %s190, 1024, %s192, [#allocation6], 64, 64, 4
        $region20: #{tpu_custom_call.1} parent=11 // pred_fallthru
          _
        // Predicated region
        $region21: #{tpu_custom_call.1} parent=11 // pred_check
          %p198 = pneg %p108
        $region22: #{tpu_custom_call.1} parent=11 // pred_check_branch
          %200 = sbr.rel (%p198) target = $region24
        $region23: #{tpu_custom_call.1} parent=11 // pred_region
          %202 = vsyncadd [#allocation9], 0
          %s203 = sshll.u32 %s3, 4
          %s204 = int_to_ptr.hbm [resolvable:$true] %s203
          %s205 = sshll.u32 [#allocation8], 4
          %s206 = int_to_ptr.vmem [resolvable:$true] %s205
          %211 = dma.hbm_to_vmem [thread:$0]  %s204, 1024, %s206, [#allocation9], 64, 64, 4
        $region24: #{tpu_custom_call.1} parent=11 // pred_fallthru
          _
        // Predicated region
        $region25: #{tpu_custom_call.1} parent=11 // pred_check
          %p212 = pneg %p129
        $region26: #{tpu_custom_call.1} parent=11 // pred_check_branch
          %214 = sbr.rel (%p212) target = $region28
        $region27: #{tpu_custom_call.1} parent=11 // pred_region
          _
        $region28: #{tpu_custom_call.1} parent=11 // pred_fallthru
          _
      $region12: #{tpu_custom_call.1} parent=5 // pred_fallthru
        _
      %p215 = scmp.lt.s32.totalorder %s19, 2
      // Predicated region
      $region29: #{tpu_custom_call.1} parent=5 // pred_check
        %p216 = pneg %p215
      $region30: #{tpu_custom_call.1} parent=5 // pred_check_branch
        %218 = sbr.rel (%p216) target = $region32
      $region31: #{tpu_custom_call.1} parent=5 // pred_region
        // Predicated region
        $region33: #{tpu_custom_call.1} parent=31 // pred_check
          %p219 = pneg %p39
        $region34: #{tpu_custom_call.1} parent=31 // pred_check_branch
          %221 = sbr.rel (%p219) target = $region36
        $region35: #{tpu_custom_call.1} parent=31 // pred_region
          %s222 = sand.u32 %s29, 1
          %s223 = scalar_lea.sflag [#allocation3], %s222
          %s224 = sand.u32 %s29, 1
          %s225 = smul.addr %s224, 40
          %s226 = scalar_lea.vmem [#allocation2], %s225
          %s227 = smul.u32 20, %s19
          %s228 = ssub.s32 38, %s227
          %p229 = scmp.lt.s32.totalorder %s228, 20
          %s230 = scalar_select %p229, %s228, 20
          %s231 = smul.u32 2, %s230
          %s232 = ssub.s32 40, %s231
          %s233 = sshll.u32 %s232, 4
          %234 = vsyncadd %s223, %s233
          %p235 = scmp.ne.s32.totalorder 0, %s231
          %s236 = smul.addr %s227, 2
          %s237 = scalar_lea.hbm %s0, %s236
          %s238 = smul.u32 2, %s230
          %s239 = sshll.u32 %s237, 4
          %s240 = int_to_ptr.hbm [resolvable:$true] %s239
          %s241 = sshll.u32 %s226, 4
          %s242 = int_to_ptr.vmem [resolvable:$true] %s241
          %s243 = sshll.u32 %s238, 4
          %247 = dma.hbm_to_vmem [thread:$0]  (%p235), %s240, %s243, %s242, %s223, 32, 32, 2
        $region36: #{tpu_custom_call.1} parent=31 // pred_fallthru
          _
      $region32: #{tpu_custom_call.1} parent=5 // pred_fallthru
        _
      %p248 = scmp.le.s32.totalorder 1, %s19
      %p249 = scmp.lt.s32.totalorder %s19, 3
      %p250 = pnand %p248, %p249
      %p251 = pneg %p250
      // Predicated region
      $region37: #{tpu_custom_call.1} parent=5 // pred_check
        _
      $region38: #{tpu_custom_call.1} parent=5 // pred_check_branch
        %253 = sbr.rel (%p250) target = $region40
      $region39: #{tpu_custom_call.1} parent=5 // pred_region
        %s254 = ssub.s32 %s19, 1
        %s255 = sand.u32 %s32, 1
        %s256 = scalar_lea.sflag [#allocation3], %s255
        %s257 = sand.u32 %s32, 1
        %s258 = smul.addr %s257, 40
        %s259 = scalar_lea.vmem [#allocation2], %s258
        // Predicated region
        $region41: #{tpu_custom_call.1} parent=39 // pred_check
          %p260 = pneg %p45
        $region42: #{tpu_custom_call.1} parent=39 // pred_check_branch
          %262 = sbr.rel (%p260) target = $region44
        $region43: #{tpu_custom_call.1} parent=39 // pred_region
          %264 = dma.done %s256, 640
        $region44: #{tpu_custom_call.1} parent=39 // pred_fallthru
          _
        // Predicated region
        $region45: #{tpu_custom_call.1} parent=39 // pred_check
          %p265 = pneg %p66
        $region46: #{tpu_custom_call.1} parent=39 // pred_check_branch
          %267 = sbr.rel (%p265) target = $region48
        $region47: #{tpu_custom_call.1} parent=39 // pred_region
          %269 = dma.done [#allocation6], 2048
        $region48: #{tpu_custom_call.1} parent=39 // pred_fallthru
          _
        // Predicated region
        $region49: #{tpu_custom_call.1} parent=39 // pred_check
          %p270 = pneg %p87
        $region50: #{tpu_custom_call.1} parent=39 // pred_check_branch
          %272 = sbr.rel (%p270) target = $region52
        $region51: #{tpu_custom_call.1} parent=39 // pred_region
          %274 = dma.done [#allocation6], 1024
        $region52: #{tpu_custom_call.1} parent=39 // pred_fallthru
          _
        // Predicated region
        $region53: #{tpu_custom_call.1} parent=39 // pred_check
          %p275 = pneg %p108
        $region54: #{tpu_custom_call.1} parent=39 // pred_check_branch
          %277 = sbr.rel (%p275) target = $region56
        $region55: #{tpu_custom_call.1} parent=39 // pred_region
          %279 = dma.done [#allocation9], 1024
        $region56: #{tpu_custom_call.1} parent=39 // pred_fallthru
          _
        %s280 = sand.u32 %s32, 1
        %s281 = scalar_lea.sflag [#allocation3], %s280
        %s282 = sand.u32 %s32, 1
        %s283 = smul.addr %s282, 40
        %s284 = scalar_lea.vmem [#allocation2], %s283
        %p285 = pneg %p45
        %p286 = pneg %p42
        %p287 = pneg %p66
        %p288 = pneg %p63
        %p289 = pneg %p87
        %p290 = pneg %p84
        %p291 = pneg %p108
        %p292 = pneg %p105
        %p293 = pneg %p129
        %p294 = pneg %p126
        %p295 = pneg %p155
        %p296 = pneg %p152
        %s297 = sand.u32 %s142, 1
        %s298 = scalar_lea.sflag [#allocation4], %s297
        %s299 = sand.u32 %s142, 1
        %s300 = smul.addr %s299, 160
        %s301 = scalar_lea.vmem [#allocation10], %s300
        %s302 = smul.u32 20, %s24
        %s303 = ssub.s32 38, %s302
        %p304 = scmp.lt.s32.totalorder %s303, 20
        %s305 = scalar_select %p304, %s303, 20
        %s306 = smul.u32 2, %s305
        %s307 = smul.u32 20, %s24
        %s308 = ssub.s32 38, %s307
        %p309 = scmp.lt.s32.totalorder %s308, 20
        %s310 = scalar_select %p309, %s308, 20
        %s311 = smul.u32 8, %s310
        %v312 = vld [vmem:[%s259] sm:$0x3]
        %v313 = vld [vmem:[%s259 + $0x2] sm:$0x3]
        %v314 = vld [vmem:[%s259 + $0x4] sm:$0x3]
        %v315 = vld [vmem:[%s259 + $0x6] sm:$0x3]
        %v316 = vld [vmem:[%s259 + $0x8] sm:$0x3]
        %v317 = vld [vmem:[%s259 + $0xa] sm:$0x3]
        %v318 = vld [vmem:[%s259 + $0xc] sm:$0x3]
        %v319 = vld [vmem:[%s259 + $0xe] sm:$0x3]
        %v320 = vld [vmem:[%s259 + $0x10] sm:$0x3]
        %v321 = vld [vmem:[%s259 + $0x12] sm:$0x3]
        %v322 = vld [vmem:[%s259 + $0x14] sm:$0x3]
        %v323 = vld [vmem:[%s259 + $0x16] sm:$0x3]
        %v324 = vld [vmem:[%s259 + $0x18] sm:$0x3]
        %v325 = vld [vmem:[%s259 + $0x1a] sm:$0x3]
        %v326 = vld [vmem:[%s259 + $0x1c] sm:$0x3]
        %v327 = vld [vmem:[%s259 + $0x1e] sm:$0x3]
        %v328 = vld [vmem:[%s259 + $0x20] sm:$0x3]
        %v329 = vld [vmem:[%s259 + $0x22] sm:$0x3]
        %v330 = vld [vmem:[%s259 + $0x24] sm:$0x3]
        %v331 = vld [vmem:[%s259 + $0x26] sm:$0x3]
        %v332 = vunpack.c.0.s8 %v312
        %v333 = vunpack.c.0.s8 %v313
        %v334 = vunpack.c.0.s8 %v314
        %v335 = vunpack.c.0.s8 %v315
        %v336 = vunpack.c.0.s8 %v316
        %v337 = vunpack.c.0.s8 %v317
        %v338 = vunpack.c.0.s8 %v318
        %v339 = vunpack.c.0.s8 %v319
        %v340 = vunpack.c.0.s8 %v320
        %v341 = vunpack.c.0.s8 %v321
        %v342 = vunpack.c.0.s8 %v322
        %v343 = vunpack.c.0.s8 %v323
        %v344 = vunpack.c.0.s8 %v324
        %v345 = vunpack.c.0.s8 %v325
        %v346 = vunpack.c.0.s8 %v326
        %v347 = vunpack.c.0.s8 %v327
        %v348 = vunpack.c.0.s8 %v328
        %v349 = vunpack.c.0.s8 %v329
        %v350 = vunpack.c.0.s8 %v330
        %v351 = vunpack.c.0.s8 %v331
        %v352 = vcvt.s32.f32 %v332
        %v353 = vcvt.s32.f32 %v333
        %v354 = vcvt.s32.f32 %v334
        %v355 = vcvt.s32.f32 %v335
        %v356 = vcvt.s32.f32 %v336
        %v357 = vcvt.s32.f32 %v337
        %v358 = vcvt.s32.f32 %v338
        %v359 = vcvt.s32.f32 %v339
        %v360 = vcvt.s32.f32 %v340
        %v361 = vcvt.s32.f32 %v341
        %v362 = vcvt.s32.f32 %v342
        %v363 = vcvt.s32.f32 %v343
        %v364 = vcvt.s32.f32 %v344
        %v365 = vcvt.s32.f32 %v345
        %v366 = vcvt.s32.f32 %v346
        %v367 = vcvt.s32.f32 %v347
        %v368 = vcvt.s32.f32 %v348
        %v369 = vcvt.s32.f32 %v349
        %v370 = vcvt.s32.f32 %v350
        %v371 = vcvt.s32.f32 %v351
        %v372 = vpack.c.bf16 %v353, %v352
        %v373 = vpack.c.bf16 %v355, %v354
        %v374 = vpack.c.bf16 %v357, %v356
        %v375 = vpack.c.bf16 %v359, %v358
        %v376 = vpack.c.bf16 %v361, %v360
        %v377 = vpack.c.bf16 %v363, %v362
        %v378 = vpack.c.bf16 %v365, %v364
        %v379 = vpack.c.bf16 %v367, %v366
        %v380 = vpack.c.bf16 %v369, %v368
        %v381 = vpack.c.bf16 %v371, %v370
        %v382 = vld [vmem:[#allocation5] sm:$0xff]
        %v383 = vld [vmem:[#allocation5 + $0x8] sm:$0xff]
        %v384 = vld [vmem:[#allocation5 + $0x10] sm:$0xff]
        %v385 = vld [vmem:[#allocation5 + $0x18] sm:$0xff]
        %v386 = vld [vmem:[#allocation5 + $0x20] sm:$0xff]
        %v387 = vld [vmem:[#allocation5 + $0x28] sm:$0xff]
        %v388 = vld [vmem:[#allocation5 + $0x30] sm:$0xff]
        %v389 = vld [vmem:[#allocation5 + $0x38] sm:$0xff]
        %v390 = vld [vmem:[#allocation5 + $0x40] sm:$0xff]
        %v391 = vld [vmem:[#allocation5 + $0x48] sm:$0xff]
        %v392 = vld [vmem:[#allocation5 + $0x50] sm:$0xff]
        %v393 = vld [vmem:[#allocation5 + $0x58] sm:$0xff]
        %v394 = vld [vmem:[#allocation5 + $0x60] sm:$0xff]
        %v395 = vld [vmem:[#allocation5 + $0x68] sm:$0xff]
        %v396 = vld [vmem:[#allocation5 + $0x70] sm:$0xff]
        %v397 = vld [vmem:[#allocation5 + $0x78] sm:$0xff]
        %v414 = vunpack.c.l.b16 %v382
        %v415 = vunpack.c.h.b16 %v382
        %v416 = vunpack.c.l.b16 %v383
        %v417 = vunpack.c.h.b16 %v383
        %v418 = vunpack.c.l.b16 %v384
        %v419 = vunpack.c.h.b16 %v384
        %v420 = vunpack.c.l.b16 %v385
        %v421 = vunpack.c.h.b16 %v385
        %v422 = vunpack.c.l.b16 %v386
        %v423 = vunpack.c.h.b16 %v386
        %v424 = vunpack.c.l.b16 %v387
        %v425 = vunpack.c.h.b16 %v387
        %v426 = vunpack.c.l.b16 %v388
        %v427 = vunpack.c.h.b16 %v388
        %v428 = vunpack.c.l.b16 %v389
        %v429 = vunpack.c.h.b16 %v389
        %v430 = vunpack.c.l.b16 %v390
        %v431 = vunpack.c.h.b16 %v390
        %v432 = vunpack.c.l.b16 %v391
        %v433 = vunpack.c.h.b16 %v391
        %v434 = vunpack.c.l.b16 %v392
        %v435 = vunpack.c.h.b16 %v392
        %v436 = vunpack.c.l.b16 %v393
        %v437 = vunpack.c.h.b16 %v393
        %v438 = vunpack.c.l.b16 %v394
        %v439 = vunpack.c.h.b16 %v394
        %v440 = vunpack.c.l.b16 %v395
        %v441 = vunpack.c.h.b16 %v395
        %v442 = vunpack.c.l.b16 %v396
        %v443 = vunpack.c.h.b16 %v396
        %v444 = vunpack.c.l.b16 %v397
        %v445 = vunpack.c.h.b16 %v397
        %v446 = vpack.c.b16 %v416, %v414
        %v447 = vpack.c.b16 %v417, %v415
        %v448 = vpack.c.b16 %v420, %v418
        %v449 = vpack.c.b16 %v421, %v419
        %v450 = vpack.c.b16 %v424, %v422
        %v451 = vpack.c.b16 %v425, %v423
        %v452 = vpack.c.b16 %v428, %v426
        %v453 = vpack.c.b16 %v429, %v427
        %v454 = vpack.c.b16 %v432, %v430
        %v455 = vpack.c.b16 %v433, %v431
        %v456 = vpack.c.b16 %v436, %v434
        %v457 = vpack.c.b16 %v437, %v435
        %v458 = vpack.c.b16 %v440, %v438
        %v459 = vpack.c.b16 %v441, %v439
        %v460 = vpack.c.b16 %v444, %v442
        %v461 = vpack.c.b16 %v445, %v443
        %478 = vmatpush.bf16.msra.mxu0 %v460
        %479 = vmatpush.bf16.msra.mxu0 %v458
        %480 = vmatpush.bf16.msra.mxu0 %v456
        %481 = vmatpush.bf16.msra.mxu0 %v454
        %482 = vmatpush.bf16.msra.mxu0 %v452
        %483 = vmatpush.bf16.msra.mxu0 %v450
        %484 = vmatpush.bf16.msra.mxu0 %v448
        %485 = vmatpush.bf16.msra.mxu0 %v446
        %486 = vmatmul.bf16.gmra.mxu0 %v372
        %v487 = vpop.f32.mrf.mxu0
        %v488 = vadd.f32 0.0, %v487
        %v489 = vpop.f32.mrf.mxu0
        %v490 = vadd.f32 0.0, %v489
        %491 = vmatmul.bf16.gmra.mxu0 %v373
        %v492 = vpop.f32.mrf.mxu0
        %v493 = vadd.f32 0.0, %v492
        %v494 = vpop.f32.mrf.mxu0
        %v495 = vadd.f32 0.0, %v494
        %496 = vmatmul.bf16.gmra.mxu0 %v374
        %v497 = vpop.f32.mrf.mxu0
        %v498 = vadd.f32 0.0, %v497
        %v499 = vpop.f32.mrf.mxu0
        %v500 = vadd.f32 0.0, %v499
        %501 = vmatmul.bf16.gmra.mxu0 %v375
        %v502 = vpop.f32.mrf.mxu0
        %v503 = vadd.f32 0.0, %v502
        %v504 = vpop.f32.mrf.mxu0
        %v505 = vadd.f32 0.0, %v504
        %506 = vmatmul.bf16.gmra.mxu0 %v376
        %v507 = vpop.f32.mrf.mxu0
        %v508 = vadd.f32 0.0, %v507
        %v509 = vpop.f32.mrf.mxu0
        %v510 = vadd.f32 0.0, %v509
        %511 = vmatmul.bf16.gmra.mxu0 %v377
        %v512 = vpop.f32.mrf.mxu0
        %v513 = vadd.f32 0.0, %v512
        %v514 = vpop.f32.mrf.mxu0
        %v515 = vadd.f32 0.0, %v514
        %516 = vmatmul.bf16.gmra.mxu0 %v378
        %v517 = vpop.f32.mrf.mxu0
        %v518 = vadd.f32 0.0, %v517
        %v519 = vpop.f32.mrf.mxu0
        %v520 = vadd.f32 0.0, %v519
        %521 = vmatmul.bf16.gmra.mxu0 %v379
        %v522 = vpop.f32.mrf.mxu0
        %v523 = vadd.f32 0.0, %v522
        %v524 = vpop.f32.mrf.mxu0
        %v525 = vadd.f32 0.0, %v524
        %526 = vmatmul.bf16.gmra.mxu0 %v380
        %v527 = vpop.f32.mrf.mxu0
        %v528 = vadd.f32 0.0, %v527
        %v529 = vpop.f32.mrf.mxu0
        %v530 = vadd.f32 0.0, %v529
        %531 = vmatmul.bf16.gmra.mxu0 %v381
        %v532 = vpop.f32.mrf.mxu0
        %v533 = vadd.f32 0.0, %v532
        %v534 = vpop.f32.mrf.mxu0
        %v535 = vadd.f32 0.0, %v534
        %536 = vdwg.mxu0
        %537 = vmatpush.bf16.msra.mxu0 %v461
        %538 = vmatpush.bf16.msra.mxu0 %v459
        %539 = vmatpush.bf16.msra.mxu0 %v457
        %540 = vmatpush.bf16.msra.mxu0 %v455
        %541 = vmatpush.bf16.msra.mxu0 %v453
        %542 = vmatpush.bf16.msra.mxu0 %v451
        %543 = vmatpush.bf16.msra.mxu0 %v449
        %544 = vmatpush.bf16.msra.mxu0 %v447
        %545 = vmatmul.bf16.gmra.mxu0 %v372
        %v546 = vpop.f32.mrf.mxu0
        %v547 = vadd.f32 0.0, %v546
        %v548 = vpop.f32.mrf.mxu0
        %v549 = vadd.f32 0.0, %v548
        %550 = vmatmul.bf16.gmra.mxu0 %v373
        %v551 = vpop.f32.mrf.mxu0
        %v552 = vadd.f32 0.0, %v551
        %v553 = vpop.f32.mrf.mxu0
        %v554 = vadd.f32 0.0, %v553
        %555 = vmatmul.bf16.gmra.mxu0 %v374
        %v556 = vpop.f32.mrf.mxu0
        %v557 = vadd.f32 0.0, %v556
        %v558 = vpop.f32.mrf.mxu0
        %v559 = vadd.f32 0.0, %v558
        %560 = vmatmul.bf16.gmra.mxu0 %v375
        %v561 = vpop.f32.mrf.mxu0
        %v562 = vadd.f32 0.0, %v561
        %v563 = vpop.f32.mrf.mxu0
        %v564 = vadd.f32 0.0, %v563
        %565 = vmatmul.bf16.gmra.mxu0 %v376
        %v566 = vpop.f32.mrf.mxu0
        %v567 = vadd.f32 0.0, %v566
        %v568 = vpop.f32.mrf.mxu0
        %v569 = vadd.f32 0.0, %v568
        %570 = vmatmul.bf16.gmra.mxu0 %v377
        %v571 = vpop.f32.mrf.mxu0
        %v572 = vadd.f32 0.0, %v571
        %v573 = vpop.f32.mrf.mxu0
        %v574 = vadd.f32 0.0, %v573
        %575 = vmatmul.bf16.gmra.mxu0 %v378
        %v576 = vpop.f32.mrf.mxu0
        %v577 = vadd.f32 0.0, %v576
        %v578 = vpop.f32.mrf.mxu0
        %v579 = vadd.f32 0.0, %v578
        %580 = vmatmul.bf16.gmra.mxu0 %v379
        %v581 = vpop.f32.mrf.mxu0
        %v582 = vadd.f32 0.0, %v581
        %v583 = vpop.f32.mrf.mxu0
        %v584 = vadd.f32 0.0, %v583
        %585 = vmatmul.bf16.gmra.mxu0 %v380
        %v586 = vpop.f32.mrf.mxu0
        %v587 = vadd.f32 0.0, %v586
        %v588 = vpop.f32.mrf.mxu0
        %v589 = vadd.f32 0.0, %v588
        %590 = vmatmul.bf16.gmra.mxu0 %v381
        %v591 = vpop.f32.mrf.mxu0
        %v592 = vadd.f32 0.0, %v591
        %v593 = vpop.f32.mrf.mxu0
        %v594 = vadd.f32 0.0, %v593
        %595 = vdwg.mxu0
        %v596 = vld [vmem:[%s4] sm:$0x1]
        %v598 = vperm.slane %v596, 0
        %v600 = vadd.f32 %v547, %v598
        %v601 = vadd.f32 %v549, %v598
        %v602 = vadd.f32 %v552, %v598
        %v603 = vadd.f32 %v554, %v598
        %v604 = vadd.f32 %v557, %v598
        %v605 = vadd.f32 %v559, %v598
        %v606 = vadd.f32 %v562, %v598
        %v607 = vadd.f32 %v564, %v598
        %v608 = vadd.f32 %v567, %v598
        %v609 = vadd.f32 %v569, %v598
        %v610 = vadd.f32 %v572, %v598
        %v611 = vadd.f32 %v574, %v598
        %v612 = vadd.f32 %v577, %v598
        %v613 = vadd.f32 %v579, %v598
        %v614 = vadd.f32 %v582, %v598
        %v615 = vadd.f32 %v584, %v598
        %v616 = vadd.f32 %v587, %v598
        %v617 = vadd.f32 %v589, %v598
        %v618 = vadd.f32 %v592, %v598
        %v619 = vadd.f32 %v594, %v598
        %v620 = vmax.f32 %v600, 0.0
        %v621 = vmax.f32 %v601, 0.0
        %v622 = vmax.f32 %v602, 0.0
        %v623 = vmax.f32 %v603, 0.0
        %v624 = vmax.f32 %v604, 0.0
        %v625 = vmax.f32 %v605, 0.0
        %v626 = vmax.f32 %v606, 0.0
        %v627 = vmax.f32 %v607, 0.0
        %v628 = vmax.f32 %v608, 0.0
        %v629 = vmax.f32 %v609, 0.0
        %v630 = vmax.f32 %v610, 0.0
        %v631 = vmax.f32 %v611, 0.0
        %v632 = vmax.f32 %v612, 0.0
        %v633 = vmax.f32 %v613, 0.0
        %v634 = vmax.f32 %v614, 0.0
        %v635 = vmax.f32 %v615, 0.0
        %v636 = vmax.f32 %v616, 0.0
        %v637 = vmax.f32 %v617, 0.0
        %v638 = vmax.f32 %v618, 0.0
        %v639 = vmax.f32 %v619, 0.0
        %v640 = vpack.c.bf16 %v621, %v620
        %v641 = vpack.c.bf16 %v623, %v622
        %v642 = vpack.c.bf16 %v625, %v624
        %v643 = vpack.c.bf16 %v627, %v626
        %v644 = vpack.c.bf16 %v629, %v628
        %v645 = vpack.c.bf16 %v631, %v630
        %v646 = vpack.c.bf16 %v633, %v632
        %v647 = vpack.c.bf16 %v635, %v634
        %v648 = vpack.c.bf16 %v637, %v636
        %v649 = vpack.c.bf16 %v639, %v638
        %v650 = vld [vmem:[#allocation7] sm:$0xf]
        %v651 = vld [vmem:[#allocation7 + $0x4] sm:$0xf]
        %v652 = vld [vmem:[#allocation7 + $0x8] sm:$0xf]
        %v653 = vld [vmem:[#allocation7 + $0xc] sm:$0xf]
        %v654 = vld [vmem:[#allocation7 + $0x10] sm:$0xf]
        %v655 = vld [vmem:[#allocation7 + $0x14] sm:$0xf]
        %v656 = vld [vmem:[#allocation7 + $0x18] sm:$0xf]
        %v657 = vld [vmem:[#allocation7 + $0x1c] sm:$0xf]
        %v658 = vld [vmem:[#allocation7 + $0x20] sm:$0xf]
        %v659 = vld [vmem:[#allocation7 + $0x24] sm:$0xf]
        %v660 = vld [vmem:[#allocation7 + $0x28] sm:$0xf]
        %v661 = vld [vmem:[#allocation7 + $0x2c] sm:$0xf]
        %v662 = vld [vmem:[#allocation7 + $0x30] sm:$0xf]
        %v663 = vld [vmem:[#allocation7 + $0x34] sm:$0xf]
        %v664 = vld [vmem:[#allocation7 + $0x38] sm:$0xf]
        %v665 = vld [vmem:[#allocation7 + $0x3c] sm:$0xf]
        %v666 = vld [vmem:[%s4 + $0x1] sm:$0x1]
        %v668 = vperm.slane %v666, 0
        %v686 = vunpack.c.l.b16 %v650
        %v687 = vunpack.c.l.b16 %v651
        %v688 = vunpack.c.l.b16 %v652
        %v689 = vunpack.c.l.b16 %v653
        %v690 = vunpack.c.l.b16 %v654
        %v691 = vunpack.c.l.b16 %v655
        %v692 = vunpack.c.l.b16 %v656
        %v693 = vunpack.c.l.b16 %v657
        %v694 = vunpack.c.l.b16 %v658
        %v695 = vunpack.c.l.b16 %v659
        %v696 = vunpack.c.l.b16 %v660
        %v697 = vunpack.c.l.b16 %v661
        %v698 = vunpack.c.l.b16 %v662
        %v699 = vunpack.c.l.b16 %v663
        %v700 = vunpack.c.l.b16 %v664
        %v701 = vunpack.c.l.b16 %v665
        %v702 = vpack.c.b16 %v687, %v686
        %v703 = vpack.c.b16 %v689, %v688
        %v704 = vpack.c.b16 %v691, %v690
        %v705 = vpack.c.b16 %v693, %v692
        %v706 = vpack.c.b16 %v695, %v694
        %v707 = vpack.c.b16 %v697, %v696
        %v708 = vpack.c.b16 %v699, %v698
        %v709 = vpack.c.b16 %v701, %v700
        %718 = vmatpush.bf16.msra.mxu0 %v709
        %719 = vmatpush.bf16.msra.mxu0 %v708
        %720 = vmatpush.bf16.msra.mxu0 %v707
        %721 = vmatpush.bf16.msra.mxu0 %v706
        %722 = vmatpush.bf16.msra.mxu0 %v705
        %723 = vmatpush.bf16.msra.mxu0 %v704
        %724 = vmatpush.bf16.msra.mxu0 %v703
        %725 = vmatpush.bf16.msra.mxu0 %v702
        %726 = vmatmul.bf16.gmra.mxu0 %v640
        %v727 = vpop.f32.mrf.mxu0
        %v728 = vadd.f32 %v668, %v727
        %v729 = vpop.f32.mrf.mxu0
        %v730 = vadd.f32 %v668, %v729
        %731 = vmatmul.bf16.gmra.mxu0 %v641
        %v732 = vpop.f32.mrf.mxu0
        %v733 = vadd.f32 %v668, %v732
        %v734 = vpop.f32.mrf.mxu0
        %v735 = vadd.f32 %v668, %v734
        %736 = vmatmul.bf16.gmra.mxu0 %v642
        %v737 = vpop.f32.mrf.mxu0
        %v738 = vadd.f32 %v668, %v737
        %v739 = vpop.f32.mrf.mxu0
        %v740 = vadd.f32 %v668, %v739
        %741 = vmatmul.bf16.gmra.mxu0 %v643
        %v742 = vpop.f32.mrf.mxu0
        %v743 = vadd.f32 %v668, %v742
        %v744 = vpop.f32.mrf.mxu0
        %v745 = vadd.f32 %v668, %v744
        %746 = vmatmul.bf16.gmra.mxu0 %v644
        %v747 = vpop.f32.mrf.mxu0
        %v748 = vadd.f32 %v668, %v747
        %v749 = vpop.f32.mrf.mxu0
        %v750 = vadd.f32 %v668, %v749
        %751 = vmatmul.bf16.gmra.mxu0 %v645
        %v752 = vpop.f32.mrf.mxu0
        %v753 = vadd.f32 %v668, %v752
        %v754 = vpop.f32.mrf.mxu0
        %v755 = vadd.f32 %v668, %v754
        %756 = vmatmul.bf16.gmra.mxu0 %v646
        %v757 = vpop.f32.mrf.mxu0
        %v758 = vadd.f32 %v668, %v757
        %v759 = vpop.f32.mrf.mxu0
        %v760 = vadd.f32 %v668, %v759
        %761 = vmatmul.bf16.gmra.mxu0 %v647
        %v762 = vpop.f32.mrf.mxu0
        %v763 = vadd.f32 %v668, %v762
        %v764 = vpop.f32.mrf.mxu0
        %v765 = vadd.f32 %v668, %v764
        %766 = vmatmul.bf16.gmra.mxu0 %v648
        %v767 = vpop.f32.mrf.mxu0
        %v768 = vadd.f32 %v668, %v767
        %v769 = vpop.f32.mrf.mxu0
        %v770 = vadd.f32 %v668, %v769
        %771 = vmatmul.bf16.gmra.mxu0 %v649
        %v772 = vpop.f32.mrf.mxu0
        %v773 = vadd.f32 %v668, %v772
        %v774 = vpop.f32.mrf.mxu0
        %v775 = vadd.f32 %v668, %v774
        %776 = vdwg.mxu0
        %v777 = vmax.f32 %v728, 0.0
        %v778 = vmax.f32 %v730, 0.0
        %v779 = vmax.f32 %v733, 0.0
        %v780 = vmax.f32 %v735, 0.0
        %v781 = vmax.f32 %v738, 0.0
        %v782 = vmax.f32 %v740, 0.0
        %v783 = vmax.f32 %v743, 0.0
        %v784 = vmax.f32 %v745, 0.0
        %v785 = vmax.f32 %v748, 0.0
        %v786 = vmax.f32 %v750, 0.0
        %v787 = vmax.f32 %v753, 0.0
        %v788 = vmax.f32 %v755, 0.0
        %v789 = vmax.f32 %v758, 0.0
        %v790 = vmax.f32 %v760, 0.0
        %v791 = vmax.f32 %v763, 0.0
        %v792 = vmax.f32 %v765, 0.0
        %v793 = vmax.f32 %v768, 0.0
        %v794 = vmax.f32 %v770, 0.0
        %v795 = vmax.f32 %v773, 0.0
        %v796 = vmax.f32 %v775, 0.0
        %v797 = vpack.c.bf16 %v778, %v777
        %v798 = vpack.c.bf16 %v780, %v779
        %v799 = vpack.c.bf16 %v782, %v781
        %v800 = vpack.c.bf16 %v784, %v783
        %v801 = vpack.c.bf16 %v786, %v785
        %v802 = vpack.c.bf16 %v788, %v787
        %v803 = vpack.c.bf16 %v790, %v789
        %v804 = vpack.c.bf16 %v792, %v791
        %v805 = vpack.c.bf16 %v794, %v793
        %v806 = vpack.c.bf16 %v796, %v795
        %v807 = vld [vmem:[#allocation8] sm:$0xf]
        %v808 = vld [vmem:[#allocation8 + $0x4] sm:$0xf]
        %v809 = vld [vmem:[#allocation8 + $0x8] sm:$0xf]
        %v810 = vld [vmem:[#allocation8 + $0xc] sm:$0xf]
        %v811 = vld [vmem:[#allocation8 + $0x10] sm:$0xf]
        %v812 = vld [vmem:[#allocation8 + $0x14] sm:$0xf]
        %v813 = vld [vmem:[#allocation8 + $0x18] sm:$0xf]
        %v814 = vld [vmem:[#allocation8 + $0x1c] sm:$0xf]
        %v815 = vld [vmem:[#allocation8 + $0x20] sm:$0xf]
        %v816 = vld [vmem:[#allocation8 + $0x24] sm:$0xf]
        %v817 = vld [vmem:[#allocation8 + $0x28] sm:$0xf]
        %v818 = vld [vmem:[#allocation8 + $0x2c] sm:$0xf]
        %v819 = vld [vmem:[#allocation8 + $0x30] sm:$0xf]
        %v820 = vld [vmem:[#allocation8 + $0x34] sm:$0xf]
        %v821 = vld [vmem:[#allocation8 + $0x38] sm:$0xf]
        %v822 = vld [vmem:[#allocation8 + $0x3c] sm:$0xf]
        %v839 = vunpack.c.l.b16 %v807
        %v840 = vunpack.c.l.b16 %v808
        %v841 = vunpack.c.l.b16 %v809
        %v842 = vunpack.c.l.b16 %v810
        %v843 = vunpack.c.l.b16 %v811
        %v844 = vunpack.c.l.b16 %v812
        %v845 = vunpack.c.l.b16 %v813
        %v846 = vunpack.c.l.b16 %v814
        %v847 = vunpack.c.l.b16 %v815
        %v848 = vunpack.c.l.b16 %v816
        %v849 = vunpack.c.l.b16 %v817
        %v850 = vunpack.c.l.b16 %v818
        %v851 = vunpack.c.l.b16 %v819
        %v852 = vunpack.c.l.b16 %v820
        %v853 = vunpack.c.l.b16 %v821
        %v854 = vunpack.c.l.b16 %v822
        %v855 = vpack.c.b16 %v840, %v839
        %v856 = vpack.c.b16 %v842, %v841
        %v857 = vpack.c.b16 %v844, %v843
        %v858 = vpack.c.b16 %v846, %v845
        %v859 = vpack.c.b16 %v848, %v847
        %v860 = vpack.c.b16 %v850, %v849
        %v861 = vpack.c.b16 %v852, %v851
        %v862 = vpack.c.b16 %v854, %v853
        %871 = vmatpush.bf16.msra.mxu0 %v862
        %872 = vmatpush.bf16.msra.mxu0 %v861
        %873 = vmatpush.bf16.msra.mxu0 %v860
        %874 = vmatpush.bf16.msra.mxu0 %v859
        %875 = vmatpush.bf16.msra.mxu0 %v858
        %876 = vmatpush.bf16.msra.mxu0 %v857
        %877 = vmatpush.bf16.msra.mxu0 %v856
        %878 = vmatpush.bf16.msra.mxu0 %v855
        %879 = vmatmul.bf16.gmra.mxu0 %v797
        %v880 = vpop.f32.mrf.mxu0
        %v881 = vadd.f32 0.0, %v880
        %v882 = vpop.f32.mrf.mxu0
        %v883 = vadd.f32 0.0, %v882
        %884 = vmatmul.bf16.gmra.mxu0 %v798
        %v885 = vpop.f32.mrf.mxu0
        %v886 = vadd.f32 0.0, %v885
        %v887 = vpop.f32.mrf.mxu0
        %v888 = vadd.f32 0.0, %v887
        %889 = vmatmul.bf16.gmra.mxu0 %v799
        %v890 = vpop.f32.mrf.mxu0
        %v891 = vadd.f32 0.0, %v890
        %v892 = vpop.f32.mrf.mxu0
        %v893 = vadd.f32 0.0, %v892
        %894 = vmatmul.bf16.gmra.mxu0 %v800
        %v895 = vpop.f32.mrf.mxu0
        %v896 = vadd.f32 0.0, %v895
        %v897 = vpop.f32.mrf.mxu0
        %v898 = vadd.f32 0.0, %v897
        %899 = vmatmul.bf16.gmra.mxu0 %v801
        %v900 = vpop.f32.mrf.mxu0
        %v901 = vadd.f32 0.0, %v900
        %v902 = vpop.f32.mrf.mxu0
        %v903 = vadd.f32 0.0, %v902
        %904 = vmatmul.bf16.gmra.mxu0 %v802
        %v905 = vpop.f32.mrf.mxu0
        %v906 = vadd.f32 0.0, %v905
        %v907 = vpop.f32.mrf.mxu0
        %v908 = vadd.f32 0.0, %v907
        %909 = vmatmul.bf16.gmra.mxu0 %v803
        %v910 = vpop.f32.mrf.mxu0
        %v911 = vadd.f32 0.0, %v910
        %v912 = vpop.f32.mrf.mxu0
        %v913 = vadd.f32 0.0, %v912
        %914 = vmatmul.bf16.gmra.mxu0 %v804
        %v915 = vpop.f32.mrf.mxu0
        %v916 = vadd.f32 0.0, %v915
        %v917 = vpop.f32.mrf.mxu0
        %v918 = vadd.f32 0.0, %v917
        %919 = vmatmul.bf16.gmra.mxu0 %v805
        %v920 = vpop.f32.mrf.mxu0
        %v921 = vadd.f32 0.0, %v920
        %v922 = vpop.f32.mrf.mxu0
        %v923 = vadd.f32 0.0, %v922
        %924 = vmatmul.bf16.gmra.mxu0 %v806
        %v925 = vpop.f32.mrf.mxu0
        %v926 = vadd.f32 0.0, %v925
        %v927 = vpop.f32.mrf.mxu0
        %v928 = vadd.f32 0.0, %v927
        %929 = vdwg.mxu0
        %v930 = vadd.f32 %v488, %v881
        %v931 = vadd.f32 %v490, %v883
        %v932 = vadd.f32 %v493, %v886
        %v933 = vadd.f32 %v495, %v888
        %v934 = vadd.f32 %v498, %v891
        %v935 = vadd.f32 %v500, %v893
        %v936 = vadd.f32 %v503, %v896
        %v937 = vadd.f32 %v505, %v898
        %v938 = vadd.f32 %v508, %v901
        %v939 = vadd.f32 %v510, %v903
        %v940 = vadd.f32 %v513, %v906
        %v941 = vadd.f32 %v515, %v908
        %v942 = vadd.f32 %v518, %v911
        %v943 = vadd.f32 %v520, %v913
        %v944 = vadd.f32 %v523, %v916
        %v945 = vadd.f32 %v525, %v918
        %v946 = vadd.f32 %v528, %v921
        %v947 = vadd.f32 %v530, %v923
        %v948 = vadd.f32 %v533, %v926
        %v949 = vadd.f32 %v535, %v928
        %v950 = vld [vmem:[%s4 + $0x2] sm:$0x1]
        %v952 = vperm.slane %v950, 0
        %v954 = vadd.f32 %v930, %v952
        %v955 = vadd.f32 %v931, %v952
        %v956 = vadd.f32 %v932, %v952
        %v957 = vadd.f32 %v933, %v952
        %v958 = vadd.f32 %v934, %v952
        %v959 = vadd.f32 %v935, %v952
        %v960 = vadd.f32 %v936, %v952
        %v961 = vadd.f32 %v937, %v952
        %v962 = vadd.f32 %v938, %v952
        %v963 = vadd.f32 %v939, %v952
        %v964 = vadd.f32 %v940, %v952
        %v965 = vadd.f32 %v941, %v952
        %v966 = vadd.f32 %v942, %v952
        %v967 = vadd.f32 %v943, %v952
        %v968 = vadd.f32 %v944, %v952
        %v969 = vadd.f32 %v945, %v952
        %v970 = vadd.f32 %v946, %v952
        %v971 = vadd.f32 %v947, %v952
        %v972 = vadd.f32 %v948, %v952
        %v973 = vadd.f32 %v949, %v952
        %v974 = vxor.u32 %v954, 2147483648
        %v975 = vxor.u32 %v955, 2147483648
        %v976 = vxor.u32 %v956, 2147483648
        %v977 = vxor.u32 %v957, 2147483648
        %v978 = vxor.u32 %v958, 2147483648
        %v979 = vxor.u32 %v959, 2147483648
        %v980 = vxor.u32 %v960, 2147483648
        %v981 = vxor.u32 %v961, 2147483648
        %v982 = vxor.u32 %v962, 2147483648
        %v983 = vxor.u32 %v963, 2147483648
        %v984 = vxor.u32 %v964, 2147483648
        %v985 = vxor.u32 %v965, 2147483648
        %v986 = vxor.u32 %v966, 2147483648
        %v987 = vxor.u32 %v967, 2147483648
        %v988 = vxor.u32 %v968, 2147483648
        %v989 = vxor.u32 %v969, 2147483648
        %v990 = vxor.u32 %v970, 2147483648
        %v991 = vxor.u32 %v971, 2147483648
        %v992 = vxor.u32 %v972, 2147483648
        %v993 = vxor.u32 %v973, 2147483648
        %v994 = vmul.f32 %v974, 1.442695
        %v995 = vpow.pop %v994
        %v996 = vmul.f32 %v975, 1.442695
        %v997 = vpow.pop %v996
        %v998 = vmul.f32 %v976, 1.442695
        %v999 = vpow.pop %v998
        %v1000 = vmul.f32 %v977, 1.442695
        %v1001 = vpow.pop %v1000
        %v1002 = vmul.f32 %v978, 1.442695
        %v1003 = vpow.pop %v1002
        %v1004 = vmul.f32 %v979, 1.442695
        %v1005 = vpow.pop %v1004
        %v1006 = vmul.f32 %v980, 1.442695
        %v1007 = vpow.pop %v1006
        %v1008 = vmul.f32 %v981, 1.442695
        %v1009 = vpow.pop %v1008
        %v1010 = vmul.f32 %v982, 1.442695
        %v1011 = vpow.pop %v1010
        %v1012 = vmul.f32 %v983, 1.442695
        %v1013 = vpow.pop %v1012
        %v1014 = vmul.f32 %v984, 1.442695
        %v1015 = vpow.pop %v1014
        %v1016 = vmul.f32 %v985, 1.442695
        %v1017 = vpow.pop %v1016
        %v1018 = vmul.f32 %v986, 1.442695
        %v1019 = vpow.pop %v1018
        %v1020 = vmul.f32 %v987, 1.442695
        %v1021 = vpow.pop %v1020
        %v1022 = vmul.f32 %v988, 1.442695
        %v1023 = vpow.pop %v1022
        %v1024 = vmul.f32 %v989, 1.442695
        %v1025 = vpow.pop %v1024
        %v1026 = vmul.f32 %v990, 1.442695
        %v1027 = vpow.pop %v1026
        %v1028 = vmul.f32 %v991, 1.442695
        %v1029 = vpow.pop %v1028
        %v1030 = vmul.f32 %v992, 1.442695
        %v1031 = vpow.pop %v1030
        %v1032 = vmul.f32 %v993, 1.442695
        %v1033 = vpow.pop %v1032
        %v1034 = vadd.f32 %v995, 1.0
        %v1035 = vadd.f32 %v997, 1.0
        %v1036 = vadd.f32 %v999, 1.0
        %v1037 = vadd.f32 %v1001, 1.0
        %v1038 = vadd.f32 %v1003, 1.0
        %v1039 = vadd.f32 %v1005, 1.0
        %v1040 = vadd.f32 %v1007, 1.0
        %v1041 = vadd.f32 %v1009, 1.0
        %v1042 = vadd.f32 %v1011, 1.0
        %v1043 = vadd.f32 %v1013, 1.0
        %v1044 = vadd.f32 %v1015, 1.0
        %v1045 = vadd.f32 %v1017, 1.0
        %v1046 = vadd.f32 %v1019, 1.0
        %v1047 = vadd.f32 %v1021, 1.0
        %v1048 = vadd.f32 %v1023, 1.0
        %v1049 = vadd.f32 %v1025, 1.0
        %v1050 = vadd.f32 %v1027, 1.0
        %v1051 = vadd.f32 %v1029, 1.0
        %v1052 = vadd.f32 %v1031, 1.0
        %v1053 = vadd.f32 %v1033, 1.0
        %v1054 = vrcp.pop %v1034
        %v1055 = vmul.f32 %v1034, %v1054
        %v1056 = vsub.f32 1.0, %v1055
        %v1057 = vmul.f32 %v1054, %v1056
        %v1058 = vadd.f32 %v1054, %v1057
        %vm1059 = vweird.f32 %v1034
        %vm1060 = vweird.f32 %v1054
        %vm1061 = vmor %vm1059, %vm1060
        %v1062 = vsel %vm1061, %v1054, %v1058
        %v1063 = vand.u32 2147483647, %v1034
        %vm1064 = vcmp.eq.f32.partialorder %v1063, 8.507059e+37
        %v1065 = vand.u32 %v1034, 2147483648
        %v1066 = vor.u32 1.1754944e-38, %v1065
        %v1067 = vsel %vm1064, %v1066, %v1062
        %v1068 = vmul.f32 1.0, %v1067
        %v1069 = vrcp.pop %v1035
        %v1070 = vmul.f32 %v1035, %v1069
        %v1071 = vsub.f32 1.0, %v1070
        %v1072 = vmul.f32 %v1069, %v1071
        %v1073 = vadd.f32 %v1069, %v1072
        %vm1074 = vweird.f32 %v1035
        %vm1075 = vweird.f32 %v1069
        %vm1076 = vmor %vm1074, %vm1075
        %v1077 = vsel %vm1076, %v1069, %v1073
        %v1078 = vand.u32 2147483647, %v1035
        %vm1079 = vcmp.eq.f32.partialorder %v1078, 8.507059e+37
        %v1080 = vand.u32 %v1035, 2147483648
        %v1081 = vor.u32 1.1754944e-38, %v1080
        %v1082 = vsel %vm1079, %v1081, %v1077
        %v1083 = vmul.f32 1.0, %v1082
        %v1084 = vrcp.pop %v1036
        %v1085 = vmul.f32 %v1036, %v1084
        %v1086 = vsub.f32 1.0, %v1085
        %v1087 = vmul.f32 %v1084, %v1086
        %v1088 = vadd.f32 %v1084, %v1087
        %vm1089 = vweird.f32 %v1036
        %vm1090 = vweird.f32 %v1084
        %vm1091 = vmor %vm1089, %vm1090
        %v1092 = vsel %vm1091, %v1084, %v1088
        %v1093 = vand.u32 2147483647, %v1036
        %vm1094 = vcmp.eq.f32.partialorder %v1093, 8.507059e+37
        %v1095 = vand.u32 %v1036, 2147483648
        %v1096 = vor.u32 1.1754944e-38, %v1095
        %v1097 = vsel %vm1094, %v1096, %v1092
        %v1098 = vmul.f32 1.0, %v1097
        %v1099 = vrcp.pop %v1037
        %v1100 = vmul.f32 %v1037, %v1099
        %v1101 = vsub.f32 1.0, %v1100
        %v1102 = vmul.f32 %v1099, %v1101
        %v1103 = vadd.f32 %v1099, %v1102
        %vm1104 = vweird.f32 %v1037
        %vm1105 = vweird.f32 %v1099
        %vm1106 = vmor %vm1104, %vm1105
        %v1107 = vsel %vm1106, %v1099, %v1103
        %v1108 = vand.u32 2147483647, %v1037
        %vm1109 = vcmp.eq.f32.partialorder %v1108, 8.507059e+37
        %v1110 = vand.u32 %v1037, 2147483648
        %v1111 = vor.u32 1.1754944e-38, %v1110
        %v1112 = vsel %vm1109, %v1111, %v1107
        %v1113 = vmul.f32 1.0, %v1112
        %v1114 = vrcp.pop %v1038
        %v1115 = vmul.f32 %v1038, %v1114
        %v1116 = vsub.f32 1.0, %v1115
        %v1117 = vmul.f32 %v1114, %v1116
        %v1118 = vadd.f32 %v1114, %v1117
        %vm1119 = vweird.f32 %v1038
        %vm1120 = vweird.f32 %v1114
        %vm1121 = vmor %vm1119, %vm1120
        %v1122 = vsel %vm1121, %v1114, %v1118
        %v1123 = vand.u32 2147483647, %v1038
        %vm1124 = vcmp.eq.f32.partialorder %v1123, 8.507059e+37
        %v1125 = vand.u32 %v1038, 2147483648
        %v1126 = vor.u32 1.1754944e-38, %v1125
        %v1127 = vsel %vm1124, %v1126, %v1122
        %v1128 = vmul.f32 1.0, %v1127
        %v1129 = vrcp.pop %v1039
        %v1130 = vmul.f32 %v1039, %v1129
        %v1131 = vsub.f32 1.0, %v1130
        %v1132 = vmul.f32 %v1129, %v1131
        %v1133 = vadd.f32 %v1129, %v1132
        %vm1134 = vweird.f32 %v1039
        %vm1135 = vweird.f32 %v1129
        %vm1136 = vmor %vm1134, %vm1135
        %v1137 = vsel %vm1136, %v1129, %v1133
        %v1138 = vand.u32 2147483647, %v1039
        %vm1139 = vcmp.eq.f32.partialorder %v1138, 8.507059e+37
        %v1140 = vand.u32 %v1039, 2147483648
        %v1141 = vor.u32 1.1754944e-38, %v1140
        %v1142 = vsel %vm1139, %v1141, %v1137
        %v1143 = vmul.f32 1.0, %v1142
        %v1144 = vrcp.pop %v1040
        %v1145 = vmul.f32 %v1040, %v1144
        %v1146 = vsub.f32 1.0, %v1145
        %v1147 = vmul.f32 %v1144, %v1146
        %v1148 = vadd.f32 %v1144, %v1147
        %vm1149 = vweird.f32 %v1040
        %vm1150 = vweird.f32 %v1144
        %vm1151 = vmor %vm1149, %vm1150
        %v1152 = vsel %vm1151, %v1144, %v1148
        %v1153 = vand.u32 2147483647, %v1040
        %vm1154 = vcmp.eq.f32.partialorder %v1153, 8.507059e+37
        %v1155 = vand.u32 %v1040, 2147483648
        %v1156 = vor.u32 1.1754944e-38, %v1155
        %v1157 = vsel %vm1154, %v1156, %v1152
        %v1158 = vmul.f32 1.0, %v1157
        %v1159 = vrcp.pop %v1041
        %v1160 = vmul.f32 %v1041, %v1159
        %v1161 = vsub.f32 1.0, %v1160
        %v1162 = vmul.f32 %v1159, %v1161
        %v1163 = vadd.f32 %v1159, %v1162
        %vm1164 = vweird.f32 %v1041
        %vm1165 = vweird.f32 %v1159
        %vm1166 = vmor %vm1164, %vm1165
        %v1167 = vsel %vm1166, %v1159, %v1163
        %v1168 = vand.u32 2147483647, %v1041
        %vm1169 = vcmp.eq.f32.partialorder %v1168, 8.507059e+37
        %v1170 = vand.u32 %v1041, 2147483648
        %v1171 = vor.u32 1.1754944e-38, %v1170
        %v1172 = vsel %vm1169, %v1171, %v1167
        %v1173 = vmul.f32 1.0, %v1172
        %v1174 = vrcp.pop %v1042
        %v1175 = vmul.f32 %v1042, %v1174
        %v1176 = vsub.f32 1.0, %v1175
        %v1177 = vmul.f32 %v1174, %v1176
        %v1178 = vadd.f32 %v1174, %v1177
        %vm1179 = vweird.f32 %v1042
        %vm1180 = vweird.f32 %v1174
        %vm1181 = vmor %vm1179, %vm1180
        %v1182 = vsel %vm1181, %v1174, %v1178
        %v1183 = vand.u32 2147483647, %v1042
        %vm1184 = vcmp.eq.f32.partialorder %v1183, 8.507059e+37
        %v1185 = vand.u32 %v1042, 2147483648
        %v1186 = vor.u32 1.1754944e-38, %v1185
        %v1187 = vsel %vm1184, %v1186, %v1182
        %v1188 = vmul.f32 1.0, %v1187
        %v1189 = vrcp.pop %v1043
        %v1190 = vmul.f32 %v1043, %v1189
        %v1191 = vsub.f32 1.0, %v1190
        %v1192 = vmul.f32 %v1189, %v1191
        %v1193 = vadd.f32 %v1189, %v1192
        %vm1194 = vweird.f32 %v1043
        %vm1195 = vweird.f32 %v1189
        %vm1196 = vmor %vm1194, %vm1195
        %v1197 = vsel %vm1196, %v1189, %v1193
        %v1198 = vand.u32 2147483647, %v1043
        %vm1199 = vcmp.eq.f32.partialorder %v1198, 8.507059e+37
        %v1200 = vand.u32 %v1043, 2147483648
        %v1201 = vor.u32 1.1754944e-38, %v1200
        %v1202 = vsel %vm1199, %v1201, %v1197
        %v1203 = vmul.f32 1.0, %v1202
        %v1204 = vrcp.pop %v1044
        %v1205 = vmul.f32 %v1044, %v1204
        %v1206 = vsub.f32 1.0, %v1205
        %v1207 = vmul.f32 %v1204, %v1206
        %v1208 = vadd.f32 %v1204, %v1207
        %vm1209 = vweird.f32 %v1044
        %vm1210 = vweird.f32 %v1204
        %vm1211 = vmor %vm1209, %vm1210
        %v1212 = vsel %vm1211, %v1204, %v1208
        %v1213 = vand.u32 2147483647, %v1044
        %vm1214 = vcmp.eq.f32.partialorder %v1213, 8.507059e+37
        %v1215 = vand.u32 %v1044, 2147483648
        %v1216 = vor.u32 1.1754944e-38, %v1215
        %v1217 = vsel %vm1214, %v1216, %v1212
        %v1218 = vmul.f32 1.0, %v1217
        %v1219 = vrcp.pop %v1045
        %v1220 = vmul.f32 %v1045, %v1219
        %v1221 = vsub.f32 1.0, %v1220
        %v1222 = vmul.f32 %v1219, %v1221
        %v1223 = vadd.f32 %v1219, %v1222
        %vm1224 = vweird.f32 %v1045
        %vm1225 = vweird.f32 %v1219
        %vm1226 = vmor %vm1224, %vm1225
        %v1227 = vsel %vm1226, %v1219, %v1223
        %v1228 = vand.u32 2147483647, %v1045
        %vm1229 = vcmp.eq.f32.partialorder %v1228, 8.507059e+37
        %v1230 = vand.u32 %v1045, 2147483648
        %v1231 = vor.u32 1.1754944e-38, %v1230
        %v1232 = vsel %vm1229, %v1231, %v1227
        %v1233 = vmul.f32 1.0, %v1232
        %v1234 = vrcp.pop %v1046
        %v1235 = vmul.f32 %v1046, %v1234
        %v1236 = vsub.f32 1.0, %v1235
        %v1237 = vmul.f32 %v1234, %v1236
        %v1238 = vadd.f32 %v1234, %v1237
        %vm1239 = vweird.f32 %v1046
        %vm1240 = vweird.f32 %v1234
        %vm1241 = vmor %vm1239, %vm1240
        %v1242 = vsel %vm1241, %v1234, %v1238
        %v1243 = vand.u32 2147483647, %v1046
        %vm1244 = vcmp.eq.f32.partialorder %v1243, 8.507059e+37
        %v1245 = vand.u32 %v1046, 2147483648
        %v1246 = vor.u32 1.1754944e-38, %v1245
        %v1247 = vsel %vm1244, %v1246, %v1242
        %v1248 = vmul.f32 1.0, %v1247
        %v1249 = vrcp.pop %v1047
        %v1250 = vmul.f32 %v1047, %v1249
        %v1251 = vsub.f32 1.0, %v1250
        %v1252 = vmul.f32 %v1249, %v1251
        %v1253 = vadd.f32 %v1249, %v1252
        %vm1254 = vweird.f32 %v1047
        %vm1255 = vweird.f32 %v1249
        %vm1256 = vmor %vm1254, %vm1255
        %v1257 = vsel %vm1256, %v1249, %v1253
        %v1258 = vand.u32 2147483647, %v1047
        %vm1259 = vcmp.eq.f32.partialorder %v1258, 8.507059e+37
        %v1260 = vand.u32 %v1047, 2147483648
        %v1261 = vor.u32 1.1754944e-38, %v1260
        %v1262 = vsel %vm1259, %v1261, %v1257
        %v1263 = vmul.f32 1.0, %v1262
        %v1264 = vrcp.pop %v1048
        %v1265 = vmul.f32 %v1048, %v1264
        %v1266 = vsub.f32 1.0, %v1265
        %v1267 = vmul.f32 %v1264, %v1266
        %v1268 = vadd.f32 %v1264, %v1267
        %vm1269 = vweird.f32 %v1048
        %vm1270 = vweird.f32 %v1264
        %vm1271 = vmor %vm1269, %vm1270
        %v1272 = vsel %vm1271, %v1264, %v1268
        %v1273 = vand.u32 2147483647, %v1048
        %vm1274 = vcmp.eq.f32.partialorder %v1273, 8.507059e+37
        %v1275 = vand.u32 %v1048, 2147483648
        %v1276 = vor.u32 1.1754944e-38, %v1275
        %v1277 = vsel %vm1274, %v1276, %v1272
        %v1278 = vmul.f32 1.0, %v1277
        %v1279 = vrcp.pop %v1049
        %v1280 = vmul.f32 %v1049, %v1279
        %v1281 = vsub.f32 1.0, %v1280
        %v1282 = vmul.f32 %v1279, %v1281
        %v1283 = vadd.f32 %v1279, %v1282
        %vm1284 = vweird.f32 %v1049
        %vm1285 = vweird.f32 %v1279
        %vm1286 = vmor %vm1284, %vm1285
        %v1287 = vsel %vm1286, %v1279, %v1283
        %v1288 = vand.u32 2147483647, %v1049
        %vm1289 = vcmp.eq.f32.partialorder %v1288, 8.507059e+37
        %v1290 = vand.u32 %v1049, 2147483648
        %v1291 = vor.u32 1.1754944e-38, %v1290
        %v1292 = vsel %vm1289, %v1291, %v1287
        %v1293 = vmul.f32 1.0, %v1292
        %v1294 = vrcp.pop %v1050
        %v1295 = vmul.f32 %v1050, %v1294
        %v1296 = vsub.f32 1.0, %v1295
        %v1297 = vmul.f32 %v1294, %v1296
        %v1298 = vadd.f32 %v1294, %v1297
        %vm1299 = vweird.f32 %v1050
        %vm1300 = vweird.f32 %v1294
        %vm1301 = vmor %vm1299, %vm1300
        %v1302 = vsel %vm1301, %v1294, %v1298
        %v1303 = vand.u32 2147483647, %v1050
        %vm1304 = vcmp.eq.f32.partialorder %v1303, 8.507059e+37
        %v1305 = vand.u32 %v1050, 2147483648
        %v1306 = vor.u32 1.1754944e-38, %v1305
        %v1307 = vsel %vm1304, %v1306, %v1302
        %v1308 = vmul.f32 1.0, %v1307
        %v1309 = vrcp.pop %v1051
        %v1310 = vmul.f32 %v1051, %v1309
        %v1311 = vsub.f32 1.0, %v1310
        %v1312 = vmul.f32 %v1309, %v1311
        %v1313 = vadd.f32 %v1309, %v1312
        %vm1314 = vweird.f32 %v1051
        %vm1315 = vweird.f32 %v1309
        %vm1316 = vmor %vm1314, %vm1315
        %v1317 = vsel %vm1316, %v1309, %v1313
        %v1318 = vand.u32 2147483647, %v1051
        %vm1319 = vcmp.eq.f32.partialorder %v1318, 8.507059e+37
        %v1320 = vand.u32 %v1051, 2147483648
        %v1321 = vor.u32 1.1754944e-38, %v1320
        %v1322 = vsel %vm1319, %v1321, %v1317
        %v1323 = vmul.f32 1.0, %v1322
        %v1324 = vrcp.pop %v1052
        %v1325 = vmul.f32 %v1052, %v1324
        %v1326 = vsub.f32 1.0, %v1325
        %v1327 = vmul.f32 %v1324, %v1326
        %v1328 = vadd.f32 %v1324, %v1327
        %vm1329 = vweird.f32 %v1052
        %vm1330 = vweird.f32 %v1324
        %vm1331 = vmor %vm1329, %vm1330
        %v1332 = vsel %vm1331, %v1324, %v1328
        %v1333 = vand.u32 2147483647, %v1052
        %vm1334 = vcmp.eq.f32.partialorder %v1333, 8.507059e+37
        %v1335 = vand.u32 %v1052, 2147483648
        %v1336 = vor.u32 1.1754944e-38, %v1335
        %v1337 = vsel %vm1334, %v1336, %v1332
        %v1338 = vmul.f32 1.0, %v1337
        %v1339 = vrcp.pop %v1053
        %v1340 = vmul.f32 %v1053, %v1339
        %v1341 = vsub.f32 1.0, %v1340
        %v1342 = vmul.f32 %v1339, %v1341
        %v1343 = vadd.f32 %v1339, %v1342
        %vm1344 = vweird.f32 %v1053
        %vm1345 = vweird.f32 %v1339
        %vm1346 = vmor %vm1344, %vm1345
        %v1347 = vsel %vm1346, %v1339, %v1343
        %v1348 = vand.u32 2147483647, %v1053
        %vm1349 = vcmp.eq.f32.partialorder %v1348, 8.507059e+37
        %v1350 = vand.u32 %v1053, 2147483648
        %v1351 = vor.u32 1.1754944e-38, %v1350
        %v1352 = vsel %vm1349, %v1351, %v1347
        %v1353 = vmul.f32 1.0, %v1352
        %1354 = vst [vmem:[%s301] sm:$0xff] %v1068
        %1355 = vst [vmem:[%s301 + $0x8] sm:$0xff] %v1083
        %1356 = vst [vmem:[%s301 + $0x10] sm:$0xff] %v1098
        %1357 = vst [vmem:[%s301 + $0x18] sm:$0xff] %v1113
        %1358 = vst [vmem:[%s301 + $0x20] sm:$0xff] %v1128
        %1359 = vst [vmem:[%s301 + $0x28] sm:$0xff] %v1143
        %1360 = vst [vmem:[%s301 + $0x30] sm:$0xff] %v1158
        %1361 = vst [vmem:[%s301 + $0x38] sm:$0xff] %v1173
        %1362 = vst [vmem:[%s301 + $0x40] sm:$0xff] %v1188
        %1363 = vst [vmem:[%s301 + $0x48] sm:$0xff] %v1203
        %1364 = vst [vmem:[%s301 + $0x50] sm:$0xff] %v1218
        %1365 = vst [vmem:[%s301 + $0x58] sm:$0xff] %v1233
        %1366 = vst [vmem:[%s301 + $0x60] sm:$0xff] %v1248
        %1367 = vst [vmem:[%s301 + $0x68] sm:$0xff] %v1263
        %1368 = vst [vmem:[%s301 + $0x70] sm:$0xff] %v1278
        %1369 = vst [vmem:[%s301 + $0x78] sm:$0xff] %v1293
        %1370 = vst [vmem:[%s301 + $0x80] sm:$0xff] %v1308
        %1371 = vst [vmem:[%s301 + $0x88] sm:$0xff] %v1323
        %1372 = vst [vmem:[%s301 + $0x90] sm:$0xff] %v1338
        %1373 = vst [vmem:[%s301 + $0x98] sm:$0xff] %v1353
        %s1374 = sand.u32 %s142, 1
        %s1375 = scalar_lea.sflag [#allocation4], %s1374
        %s1376 = sand.u32 %s142, 1
        %s1377 = smul.addr %s1376, 160
        %s1378 = scalar_lea.vmem [#allocation10], %s1377
        // Predicated region
        $region57: #{tpu_custom_call.1} parent=39 // pred_check
          %p1379 = pneg %p152
        $region58: #{tpu_custom_call.1} parent=39 // pred_check_branch
          %1381 = sbr.rel (%p1379) target = $region60
        $region59: #{tpu_custom_call.1} parent=39 // pred_region
          %s1382 = smul.u32 20, %s24
          %s1383 = ssub.s32 38, %s1382
          %p1384 = scmp.lt.s32.totalorder %s1383, 20
          %s1385 = scalar_select %p1384, %s1383, 20
          %s1386 = smul.u32 8, %s1385
          %s1387 = ssub.s32 160, %s1386
          %s1388 = sshll.u32 %s1387, 4
          %1389 = vsyncadd %s1375, %s1388
          %p1390 = scmp.ne.s32.totalorder 0, %s1386
          %s1391 = smul.addr %s1382, 8
          %s1392 = scalar_lea.hbm %s5, %s1391
          %s1393 = smul.u32 8, %s1385
          %s1394 = sshll.u32 %s1378, 4
          %s1395 = int_to_ptr.vmem [resolvable:$true] %s1394
          %s1396 = sshll.u32 %s1392, 4
          %s1397 = int_to_ptr.hbm [resolvable:$true] %s1396
          %s1398 = sshll.u32 %s1393, 4
          %1402 = dma.vmem_to_hbm [thread:$0]  (%p1390), %s1395, %s1398, %s1397, %s1375, 128, 128, 8
        $region60: #{tpu_custom_call.1} parent=39 // pred_fallthru
          _
      $region40: #{tpu_custom_call.1} parent=5 // pred_fallthru
        _
      %p1403 = scmp.le.s32.totalorder 2, %s19
      // Predicated region
      $region61: #{tpu_custom_call.1} parent=5 // pred_check
        %p1404 = pneg %p1403
      $region62: #{tpu_custom_call.1} parent=5 // pred_check_branch
        %1406 = sbr.rel (%p1404) target = $region64
      $region63: #{tpu_custom_call.1} parent=5 // pred_region
        %s1407 = ssub.s32 %s19, 2
        // Predicated region
        $region65: #{tpu_custom_call.1} parent=63 // pred_check
          %p1408 = pneg %p158
        $region66: #{tpu_custom_call.1} parent=63 // pred_check_branch
          %1410 = sbr.rel (%p1408) target = $region68
        $region67: #{tpu_custom_call.1} parent=63 // pred_region
          %s1411 = sand.u32 %s143, 1
          %s1412 = scalar_lea.sflag [#allocation4], %s1411
          %s1413 = sand.u32 %s143, 1
          %s1414 = smul.addr %s1413, 160
          %s1415 = scalar_lea.vmem [#allocation10], %s1414
          %1417 = dma.done %s1412, 2560
        $region68: #{tpu_custom_call.1} parent=63 // pred_fallthru
          _
      $region64: #{tpu_custom_call.1} parent=5 // pred_fallthru
        _
    $region6: #{tpu_custom_call.1} parent=1 // loop_footer
      %s23 = sadd.s32 1, %s19
    $region7: #{tpu_custom_call.1} parent=1 // loop_footer_branch
      %18 = sbr.rel target = $region3
    $region8: #{tpu_custom_call.1} parent=1 // loop_exit
      _
    %1418 = vsyncpa [#allocation3], 1
    %s1419 = scalar_lea.sflag [#allocation3], 1
    %1420 = vsyncpa %s1419, 1
    %1421 = vsyncpa [#allocation6], 1
    %1422 = vsyncpa [#allocation9], 1
    %1423 = vsyncpa [#allocation4], 1
    %s1424 = scalar_lea.sflag [#allocation4], 1
    %1425 = vsyncpa %s1424, 1

</llo_original>
